<compile_context>
chip_gen: v7x
topology: tpu7x:2x2x1
jax: 0.10.0
libtpu: 0.0.40
codegen_flags: <defaults>
</compile_context>

<pallas_src>
import jax
import jax.numpy as jnp
from jax.experimental import pallas as pl
from jax.experimental.pallas import tpu as pltpu

IN_F = 1                       # nn.Linear(1, 20)
HID = 20
OUT_F = 1                      # nn.Linear(20, 1)

LANE = 128                     # vreg lane width on every TPU generation
HID_PAD = -(-HID // 8) * 8     # 20 -> 24: sublane-aligned hidden dimension


def mlp_kernel(x_ref, w1_ref, b1_ref, w2_ref, b2_ref, o_ref):
    # x_ref:  (1, BLK)       batch tile along lanes
    # w1_ref: (HID_PAD, 1)   hidden weights along sublanes (zero padded past HID)
    # b1_ref: (HID_PAD, 1)
    # w2_ref: (HID_PAD, 1)
    # b2_ref: (1, 1)         scalar output bias, in SMEM
    # o_ref:  (1, BLK)       lane-dense output tile
    x = x_ref[...]                                            # (1, BLK)
    # Hidden layer: rank-1 outer product + bias + ReLU, entirely on the VPU.
    h = jnp.maximum(w1_ref[...] * x + b1_ref[...], 0.0)       # (HID_PAD, BLK)
    # Output layer: weighted sublane reduction (XLU) + scalar bias.
    y = jnp.sum(h * w2_ref[...], axis=0, keepdims=True)       # (1, BLK)
    o_ref[...] = y + b2_ref[0, 0]


def net_forward(x, w1, b1, w2, b2):
    """x: (batch, 1); w1: (IN_F, HID); b1: (1, HID); w2: (HID, OUT_F); b2: (1, OUT_F)."""
    batch = x.shape[0]
    # Pad the batch (lane axis) to a multiple of the lane tile; cap the tile at 1024
    # lanes so large batches amortize the per-grid-step overhead.
    bp = max(LANE, -(-batch // LANE) * LANE)
    blk = min(bp, 1024)
    bp = -(-bp // blk) * blk
    grid = (bp // blk,)

    # Layout plumbing only (no compute hoisted into the wrapper): put batch in lanes,
    # hidden weights in sublane-aligned columns, all zero padded.
    x_row = jnp.pad(x.astype(jnp.float32).reshape(1, batch),
                    ((0, 0), (0, bp - batch)))
    w1_col = jnp.pad(w1.astype(jnp.float32).reshape(HID, 1),
                     ((0, HID_PAD - HID), (0, 0)))
    b1_col = jnp.pad(b1.astype(jnp.float32).reshape(HID, 1),
                     ((0, HID_PAD - HID), (0, 0)))
    w2_col = jnp.pad(w2.astype(jnp.float32).reshape(HID, 1),
                     ((0, HID_PAD - HID), (0, 0)))
    b2_s = b2.astype(jnp.float32).reshape(1, 1)

    y_row = pl.pallas_call(
        mlp_kernel,
        out_shape=jax.ShapeDtypeStruct((1, bp), jnp.float32),
        grid=grid,
        in_specs=[
            pl.BlockSpec((1, blk), lambda i: (0, i),
                         memory_space=pltpu.MemorySpace.VMEM),      # x tile
            pl.BlockSpec((HID_PAD, 1), lambda i: (0, 0),
                         memory_space=pltpu.MemorySpace.VMEM),      # w1 (resident)
            pl.BlockSpec((HID_PAD, 1), lambda i: (0, 0),
                         memory_space=pltpu.MemorySpace.VMEM),      # b1 (resident)
            pl.BlockSpec((HID_PAD, 1), lambda i: (0, 0),
                         memory_space=pltpu.MemorySpace.VMEM),      # w2 (resident)
            pl.BlockSpec(memory_space=pltpu.MemorySpace.SMEM),      # b2 scalar
        ],
        out_specs=pl.BlockSpec((1, blk), lambda i: (0, i),
                               memory_space=pltpu.MemorySpace.VMEM),
        compiler_params=pltpu.CompilerParams(
            # Independent batch tiles: shards across v7x's 2 TensorCores; no-op on v5e/v6e.
            dimension_semantics=("parallel",)),
    )(x_row, w1_col, b1_col, w2_col, b2_s)

    return y_row[0, :batch].reshape(batch, OUT_F)


if __name__ == "__main__":
    BATCH = 8
    key = jax.random.PRNGKey(0)
    kx, k1, k2, k3, k4 = jax.random.split(key, 5)

    # Deterministic params (PyTorch Linear default: U(-1/sqrt(fan_in), 1/sqrt(fan_in)))
    w1 = jax.random.uniform(k1, (IN_F, HID), jnp.float32, -1.0, 1.0)       # fan_in=1
    b1 = jax.random.uniform(k2, (1, HID), jnp.float32, -1.0, 1.0)
    bound2 = 1.0 / (HID ** 0.5)
    w2 = jax.random.uniform(k3, (HID, OUT_F), jnp.float32, -bound2, bound2)
    b2 = jax.random.uniform(k4, (1, OUT_F), jnp.float32, -bound2, bound2)

    x = jax.random.normal(kx, (BATCH, IN_F), jnp.float32)

    y = jax.jit(net_forward)(x, w1, b1, w2, b2)
    jax.block_until_ready(y)

    # Pure-JAX reference check
    ref = jnp.maximum(x @ w1 + b1, 0.0) @ w2 + b2
    assert y.shape == (BATCH, OUT_F)
    assert jnp.allclose(y, ref, atol=1e-5, rtol=1e-5)

    print("KERNEL_OK")
</pallas_src>

<mosaic_0001>
module attributes {stable_mosaic.version = 11 : i64} {
  func.func @mlp_kernel(%arg0: i32, %arg1: memref<1x128xf32, #tpu.memory_space<vmem>>, %arg2: memref<24x1xf32, #tpu.memory_space<vmem>>, %arg3: memref<24x1xf32, #tpu.memory_space<vmem>>, %arg4: memref<24x1xf32, #tpu.memory_space<vmem>>, %arg5: memref<1x1xf32, #tpu.memory_space<smem>>, %arg6: memref<1x128xf32, #tpu.memory_space<vmem>>) attributes {dimension_semantics = [#tpu.dimension_semantics<parallel>], iteration_bounds = array<i64: 1>, scalar_prefetch = 0 : i64, scratch_operands = 0 : i64, tpu.core_type = #tpu.core_type<tc>, window_params = [{transform_indices = @transform_0, window_bounds = array<i64: 1, 128>}, {pipeline_mode = #tpu.pipeline_mode<synchronous>, transform_indices = @transform_1, window_bounds = array<i64: 24, 1>}, {pipeline_mode = #tpu.pipeline_mode<synchronous>, transform_indices = @transform_2, window_bounds = array<i64: 24, 1>}, {pipeline_mode = #tpu.pipeline_mode<synchronous>, transform_indices = @transform_3, window_bounds = array<i64: 24, 1>}, {transform_indices = @transform_4, window_bounds = array<i64: 1, 1>}, {transform_indices = @transform_5, window_bounds = array<i64: 1, 128>}]} {
    %c0 = arith.constant 0 : index
    %c0_0 = arith.constant 0 : index
    %0 = vector.load %arg1[%c0, %c0_0] : memref<1x128xf32, #tpu.memory_space<vmem>>, vector<1x128xf32>
    %c0_1 = arith.constant 0 : index
    %c0_2 = arith.constant 0 : index
    %1 = vector.load %arg2[%c0_1, %c0_2] : memref<24x1xf32, #tpu.memory_space<vmem>>, vector<24x1xf32>
    %2 = vector.broadcast %1 : vector<24x1xf32> to vector<24x128xf32>
    %3 = vector.broadcast %0 : vector<1x128xf32> to vector<24x128xf32>
    %4 = arith.mulf %2, %3 : vector<24x128xf32>
    %c0_3 = arith.constant 0 : index
    %c0_4 = arith.constant 0 : index
    %5 = vector.load %arg3[%c0_3, %c0_4] : memref<24x1xf32, #tpu.memory_space<vmem>>, vector<24x1xf32>
    %6 = vector.broadcast %5 : vector<24x1xf32> to vector<24x128xf32>
    %7 = arith.addf %4, %6 : vector<24x128xf32>
    %cst = arith.constant 0.000000e+00 : f32
    %8 = vector.broadcast %cst : f32 to vector<24x128xf32>
    %9 = arith.maximumf %7, %8 : vector<24x128xf32>
    %c0_5 = arith.constant 0 : index
    %c0_6 = arith.constant 0 : index
    %10 = vector.load %arg4[%c0_5, %c0_6] : memref<24x1xf32, #tpu.memory_space<vmem>>, vector<24x1xf32>
    %11 = vector.broadcast %10 : vector<24x1xf32> to vector<24x128xf32>
    %12 = arith.mulf %9, %11 : vector<24x128xf32>
    %cst_7 = arith.constant dense<0.000000e+00> : vector<128xf32>
    %13 = vector.multi_reduction <add>, %12, %cst_7 [0] : vector<24x128xf32> to vector<128xf32>
    %14 = vector.shape_cast %13 : vector<128xf32> to vector<1x128xf32>
    %c0_8 = arith.constant 0 : index
    %c0_9 = arith.constant 0 : index
    %15 = memref.load %arg5[%c0_8, %c0_9] : memref<1x1xf32, #tpu.memory_space<smem>>
    %16 = vector.broadcast %15 : f32 to vector<1x128xf32>
    %17 = arith.addf %14, %16 : vector<1x128xf32>
    %c0_10 = arith.constant 0 : index
    %c0_11 = arith.constant 0 : index
    %18 = vector.load %arg6[%c0_10, %c0_11] : memref<1x128xf32, #tpu.memory_space<vmem>>, vector<1x128xf32>
    tpu.vector_store %arg6[%c0_10, %c0_11], %17 {strides = array<i32>} : memref<1x128xf32, #tpu.memory_space<vmem>>, vector<1x128xf32>,
    return
  }
  func.func @transform_0(%arg0: i32) -> (i32, i32) {
    %c0_i32 = arith.constant 0 : i32
    %c0_i32_0 = arith.constant 0 : i32
    return %c0_i32, %arg0 : i32, i32
  }
  func.func @transform_1(%arg0: i32) -> (i32, i32) {
    %c0_i32 = arith.constant 0 : i32
    %c0_i32_0 = arith.constant 0 : i32
    %c0_i32_1 = arith.constant 0 : i32
    return %c0_i32, %c0_i32_0 : i32, i32
  }
  func.func @transform_2(%arg0: i32) -> (i32, i32) {
    %c0_i32 = arith.constant 0 : i32
    %c0_i32_0 = arith.constant 0 : i32
    %c0_i32_1 = arith.constant 0 : i32
    return %c0_i32, %c0_i32_0 : i32, i32
  }
  func.func @transform_3(%arg0: i32) -> (i32, i32) {
    %c0_i32 = arith.constant 0 : i32
    %c0_i32_0 = arith.constant 0 : i32
    %c0_i32_1 = arith.constant 0 : i32
    return %c0_i32, %c0_i32_0 : i32, i32
  }
  func.func @transform_4(%arg0: i32) -> (i32, i32) {
    %c0_i32 = arith.constant 0 : i32
    %c0_i32_0 = arith.constant 0 : i32
    %c0_i32_1 = arith.constant 0 : i32
    return %c0_i32, %c0_i32_0 : i32, i32
  }
  func.func @transform_5(%arg0: i32) -> (i32, i32) {
    %c0_i32 = arith.constant 0 : i32
    %c0_i32_0 = arith.constant 0 : i32
    return %c0_i32, %arg0 : i32, i32
  }
}

</mosaic_0001>

<llo_original>
// kernel: net_forward.1
$region0: #{net_forward.1}
  #allocation0 [shape = 'u32[]', space=smem, size = 0x4, offset = 0x4, fixed_abs, tag = 'smem constant byte address 0x4 - core index']
  #allocation1 [shape = 'u32[144,128]{1,0:T(1,128)}', space=vmem, size = 0x12000, scoped, tag = 'internal scratch']
  #allocation2 [shape = 'f32[1,1]{1,0:T(1,128)S(6)}', space=smem, size = 0x200, scoped, tag = 'scoped memory for net_forward.1']
  %s0 = inlined_call_operand.vmem [shape: f32[1,128], index: 0, kind: input, shape index: {}]
  %s1 = inlined_call_operand.vmem [shape: f32[24,1], index: 1, kind: input, shape index: {}]
  %s2 = inlined_call_operand.vmem [shape: f32[24,1], index: 2, kind: input, shape index: {}]
  %s3 = inlined_call_operand.vmem [shape: f32[24,1], index: 3, kind: input, shape index: {}]
  %s4 = inlined_call_operand.<no memory space> [shape: f32[1,1], index: 4, kind: input, shape index: {}]
  %s5 = inlined_call_operand.vmem [shape: f32[1,128], index: 5, kind: output, shape index: {}]
  %s6 = sld [smem:[#allocation0]]
  $region30: #{net_forward.1} parent=0
    _
  %s8 = ssub.s32 1, %s6
  %s9 = scalar_select 0, %s8, %s6
  %10 = sst [smem:[#allocation2]] %s4
  // Predicated region
  $region2: #{net_forward.1} parent=0 // pred_check
    _
  $region3: #{net_forward.1} parent=0 // pred_check_branch
    %12 = sbr.rel (0) target = $region5
  $region4: #{net_forward.1} parent=0 // pred_region
    _
  $region5: #{net_forward.1} parent=0 // pred_fallthru
    _
  // Predicated region
  $region6: #{net_forward.1} parent=0 // pred_check
    _
  $region7: #{net_forward.1} parent=0 // pred_check_branch
    %14 = sbr.rel (0) target = $region9
  $region8: #{net_forward.1} parent=0 // pred_region
    _
  $region9: #{net_forward.1} parent=0 // pred_fallthru
    _
  // Predicated region
  $region10: #{net_forward.1} parent=0 // pred_check
    _
  $region11: #{net_forward.1} parent=0 // pred_check_branch
    %16 = sbr.rel (0) target = $region13
  $region12: #{net_forward.1} parent=0 // pred_region
    _
  $region13: #{net_forward.1} parent=0 // pred_fallthru
    _
  // Predicated region
  $region14: #{net_forward.1} parent=0 // pred_check
    _
  $region15: #{net_forward.1} parent=0 // pred_check_branch
    %18 = sbr.rel (0) target = $region17
  $region16: #{net_forward.1} parent=0 // pred_region
    _
  $region17: #{net_forward.1} parent=0 // pred_fallthru
    _
  // Predicated region
  $region18: #{net_forward.1} parent=0 // pred_check
    _
  $region19: #{net_forward.1} parent=0 // pred_check_branch
    %20 = sbr.rel (0) target = $region21
  $region20: #{net_forward.1} parent=0 // pred_region
    _
  $region21: #{net_forward.1} parent=0 // pred_fallthru
    _
  %v21 = vld [vmem:[%s0] sm:$0x1]
  %v22 = vld [vmem:[%s1] sm:$0xff]
  %v23 = vld [vmem:[%s1 + $0x8] sm:$0xff]
  %v24 = vld [vmem:[%s1 + $0x10] sm:$0xff]
  %26 = vset.pattern.permute.xlu0 0
  %27 = vperm.xlu0 %26, %v22
  %v28 = vpop.permute.xlu0 %27
  %31 = vset.pattern.permute.xlu0 0
  %32 = vperm.xlu0 %31, %v23
  %v33 = vpop.permute.xlu0 %32
  %36 = vset.pattern.permute.xlu0 0
  %37 = vperm.xlu0 %36, %v24
  %v38 = vpop.permute.xlu0 %37
  %v41 = vlaneseq
  %v42 = vshrl.u32 %v41, 7
  %v43 = vsub.s32 0, %v42
  %v44 = vrot.slane %v21, %v43
  %v46 = vmul.f32 %v28, %v44
  %v47 = vmul.f32 %v33, %v44
  %v48 = vmul.f32 %v38, %v44
  %v49 = vld [vmem:[%s2] sm:$0xff]
  %v50 = vld [vmem:[%s2 + $0x8] sm:$0xff]
  %v51 = vld [vmem:[%s2 + $0x10] sm:$0xff]
  %53 = vset.pattern.permute.xlu0 0
  %54 = vperm.xlu0 %53, %v49
  %v55 = vpop.permute.xlu0 %54
  %58 = vset.pattern.permute.xlu0 0
  %59 = vperm.xlu0 %58, %v50
  %v60 = vpop.permute.xlu0 %59
  %63 = vset.pattern.permute.xlu0 0
  %64 = vperm.xlu0 %63, %v51
  %v65 = vpop.permute.xlu0 %64
  %v67 = vadd.f32 %v46, %v55
  %v68 = vadd.f32 %v47, %v60
  %v69 = vadd.f32 %v48, %v65
  %v70 = vmax.f32 %v67, 0.0
  %v71 = vmax.f32 %v68, 0.0
  %v72 = vmax.f32 %v69, 0.0
  %v73 = vld [vmem:[%s3] sm:$0xff]
  %v74 = vld [vmem:[%s3 + $0x8] sm:$0xff]
  %v75 = vld [vmem:[%s3 + $0x10] sm:$0xff]
  %77 = vset.pattern.permute.xlu0 0
  %78 = vperm.xlu0 %77, %v73
  %v79 = vpop.permute.xlu0 %78
  %82 = vset.pattern.permute.xlu0 0
  %83 = vperm.xlu0 %82, %v74
  %v84 = vpop.permute.xlu0 %83
  %87 = vset.pattern.permute.xlu0 0
  %88 = vperm.xlu0 %87, %v75
  %v89 = vpop.permute.xlu0 %88
  %v91 = vmul.f32 %v70, %v79
  %v92 = vmul.f32 %v71, %v84
  %v93 = vmul.f32 %v72, %v89
  %v94 = vadd.f32 %v91, %v92
  %v95 = vadd.f32 %v94, %v93
  %v96 = vrot.slane %v95, 4
  %v97 = vadd.f32 %v95, %v96
  %v98 = vrot.slane %v97, 2
  %v99 = vadd.f32 %v97, %v98
  %v100 = vrot.slane %v99, 1
  %v101 = vadd.f32 %v99, %v100
  %s102 = sld [smem:[#allocation2]]
  %v103 = vstv %s102
  %v104 = vadd.f32 %v101, %v103
  %105 = vst [vmem:[%s5] sm:$0x1] %v104
  // Predicated region
  $region22: #{net_forward.1} parent=0 // pred_check
    _
  $region23: #{net_forward.1} parent=0 // pred_check_branch
    %107 = sbr.rel (0) target = $region25
  $region24: #{net_forward.1} parent=0 // pred_region
    _
  $region25: #{net_forward.1} parent=0 // pred_fallthru
    _
  // Predicated region
  $region26: #{net_forward.1} parent=0 // pred_check
    _
  $region27: #{net_forward.1} parent=0 // pred_check_branch
    %109 = sbr.rel (0) target = $region29
  $region28: #{net_forward.1} parent=0 // pred_region
    _
  $region29: #{net_forward.1} parent=0 // pred_fallthru
    _

</llo_original>
